<compile_context>
chip_gen: v7x
topology: tpu7x:2x2x1
jax: 0.10.0
libtpu: 0.0.40
codegen_flags: <defaults>
</compile_context>

<pallas_src>
import jax
import jax.numpy as jnp
from jax.experimental import pallas as pl
from jax.experimental.pallas import tpu as pltpu


LANE = 128
MAX_TILE = 512
VMEM_LIMIT_BYTES = 32 * 1024 * 1024    # v6e/v7x scoped default; raises v5e's 16 MiB
RESIDENT_W_BYTES = 8 * 1024 * 1024     # max double-buffered resident W (fused path)


# --------------------------------------------------------------------------- #
# Padding / tiling helpers
# --------------------------------------------------------------------------- #
def _round_up(x: int, m: int) -> int:
    return (x + m - 1) // m * m


def _pad_feature_dim(d: int) -> int:
    # v6e/v7x MXUs are 2x256^2: pad feature dims >= ~192 to multiples of 256 so
    # the result dim fills the array; tiny dims stay 128-padded (zero-FLOP
    # padding would dominate).  v5e (4x128^2) is already fully fed at 128.
    if d >= 192:
        return _round_up(d, 256)
    return _round_up(max(d, LANE), LANE)


def _padded_nodes(n: int) -> int:
    np128 = _round_up(max(n, LANE), LANE)
    np512 = _round_up(np128, MAX_TILE)
    # Prefer 512-aligned Np (512-wide contraction tiles, big DMAs, short k-loop)
    # whenever the extra zero rows cost <= ~12.5%; small graphs keep 128
    # alignment so the N^2 adjacency stream is not inflated.
    return np512 if np512 * 8 <= np128 * 9 else np128


def _pick_tile(total: int, max_tile: int = MAX_TILE, min_blocks: int = 1) -> int:
    """Largest 128-multiple <= max_tile dividing `total`, preferring >= min_blocks blocks."""
    for t in range(min(max_tile, total), LANE - 1, -LANE):
        if total % t == 0 and total // t >= min_blocks:
            return t
    for t in range(min(max_tile, total), LANE - 1, -LANE):
        if total % t == 0:
            return t
    return LANE


def _pad2(x, rows: int, cols: int, dtype):
    if x.shape == (rows, cols) and x.dtype == dtype:
        return x
    return jnp.zeros((rows, cols), dtype).at[: x.shape[0], : x.shape[1]].set(
        x.astype(dtype))


# --------------------------------------------------------------------------- #
# Kernels
# --------------------------------------------------------------------------- #
def _aggregate_kernel(a_ref, f_ref, b_ref, out_ref, acc_ref):
    """out = A @ F + b.   grid = (row block i, node-contraction block k)."""
    k = pl.program_id(1)

    @pl.when(k == 0)
    def _init():
        acc_ref[...] = jnp.zeros_like(acc_ref)

    acc_ref[...] += jnp.dot(a_ref[...].astype(jnp.bfloat16),
                            f_ref[...].astype(jnp.bfloat16),
                            preferred_element_type=jnp.float32)

    @pl.when(k == pl.num_programs(1) - 1)
    def _finalize():
        out_ref[...] = (acc_ref[...] + b_ref[...]).astype(out_ref.dtype)


def _fused_kernel(a_ref, x_ref, w_ref, b_ref, out_ref, acc_ref):
    """out = (A @ X) @ W + b with resident W.  grid = (row block i, node block k)."""
    k = pl.program_id(1)

    @pl.when(k == 0)
    def _init():
        acc_ref[...] = jnp.zeros_like(acc_ref)

    acc_ref[...] += jnp.dot(a_ref[...].astype(jnp.bfloat16),
                            x_ref[...].astype(jnp.bfloat16),
                            preferred_element_type=jnp.float32)

    @pl.when(k == pl.num_programs(1) - 1)
    def _finalize():
        support = acc_ref[...].astype(jnp.bfloat16)
        out = jnp.dot(support, w_ref[...].astype(jnp.bfloat16),
                      preferred_element_type=jnp.float32) + b_ref[...]
        out_ref[...] = out.astype(out_ref.dtype)


def _linear_kernel(x_ref, w_ref, b_ref, out_ref, acc_ref):
    """out = X @ W + b.   grid = (row block i, out-col block j, in-col block k)."""
    k = pl.program_id(2)

    @pl.when(k == 0)
    def _init():
        acc_ref[...] = jnp.zeros_like(acc_ref)

    acc_ref[...] += jnp.dot(x_ref[...].astype(jnp.bfloat16),
                            w_ref[...].astype(jnp.bfloat16),
                            preferred_element_type=jnp.float32)

    @pl.when(k == pl.num_programs(2) - 1)
    def _finalize():
        out_ref[...] = (acc_ref[...] + b_ref[...]).astype(out_ref.dtype)


# --------------------------------------------------------------------------- #
# pallas_call wrappers
# --------------------------------------------------------------------------- #
def _call_aggregate(a_p, f_p, b_p, out_dtype):
    n_p = a_p.shape[0]
    d_p = f_p.shape[1]
    tm = _pick_tile(n_p, min_blocks=2)     # >= 2 row blocks keeps both v7x TCs busy
    tk = _pick_tile(n_p)
    grid = (n_p // tm, n_p // tk)
    flops = 2 * n_p * n_p * d_p
    bytes_accessed = (a_p.size * a_p.dtype.itemsize
                      + f_p.size * f_p.dtype.itemsize * grid[0]
                      + b_p.size * 4
                      + n_p * d_p * jnp.dtype(out_dtype).itemsize)
    return pl.pallas_call(
        _aggregate_kernel,
        out_shape=jax.ShapeDtypeStruct((n_p, d_p), out_dtype),
        grid_spec=pltpu.PrefetchScalarGridSpec(
            num_scalar_prefetch=0,
            grid=grid,
            in_specs=[
                pl.BlockSpec((tm, tk), lambda i, k: (i, k)),        # A tile
                pl.BlockSpec((tk, d_p), lambda i, k: (k, 0)),       # F tile
                pl.BlockSpec((1, d_p), lambda i, k: (0, 0)),        # bias (resident)
            ],
            out_specs=pl.BlockSpec((tm, d_p), lambda i, k: (i, 0)),
            scratch_shapes=[pltpu.VMEM((tm, d_p), jnp.float32)],
        ),
        compiler_params=pltpu.CompilerParams(
            dimension_semantics=("parallel", "arbitrary"),
            vmem_limit_bytes=VMEM_LIMIT_BYTES),
        cost_estimate=pl.CostEstimate(flops=flops, transcendentals=0,
                                      bytes_accessed=bytes_accessed),
    )(a_p, f_p, b_p)


def _call_fused(a_p, x_p, w_p, b_p, out_dtype):
    n_p, d_in_p = x_p.shape
    d_out_p = w_p.shape[1]
    tm = _pick_tile(n_p, min_blocks=2)
    tk = _pick_tile(n_p)
    grid = (n_p // tm, n_p // tk)
    flops = 2 * n_p * n_p * d_in_p + 2 * n_p * d_in_p * d_out_p
    bytes_accessed = (a_p.size * a_p.dtype.itemsize
                      + x_p.size * x_p.dtype.itemsize * grid[0]
                      + w_p.size * w_p.dtype.itemsize
                      + b_p.size * 4
                      + n_p * d_out_p * jnp.dtype(out_dtype).itemsize)
    return pl.pallas_call(
        _fused_kernel,
        out_shape=jax.ShapeDtypeStruct((n_p, d_out_p), out_dtype),
        grid_spec=pltpu.PrefetchScalarGridSpec(
            num_scalar_prefetch=0,
            grid=grid,
            in_specs=[
                pl.BlockSpec((tm, tk), lambda i, k: (i, k)),            # A tile
                pl.BlockSpec((tk, d_in_p), lambda i, k: (k, 0)),        # X tile
                pl.BlockSpec((d_in_p, d_out_p), lambda i, k: (0, 0)),   # W (resident)
                pl.BlockSpec((1, d_out_p), lambda i, k: (0, 0)),        # bias (resident)
            ],
            out_specs=pl.BlockSpec((tm, d_out_p), lambda i, k: (i, 0)),
            scratch_shapes=[pltpu.VMEM((tm, d_in_p), jnp.float32)],
        ),
        compiler_params=pltpu.CompilerParams(
            dimension_semantics=("parallel", "arbitrary"),
            vmem_limit_bytes=VMEM_LIMIT_BYTES),
        cost_estimate=pl.CostEstimate(flops=flops, transcendentals=0,
                                      bytes_accessed=bytes_accessed),
    )(a_p, x_p, w_p, b_p)


def _call_linear(x_p, w_p, b_p, out_dtype):
    n_p, d_in_p = x_p.shape
    d_out_p = w_p.shape[1]
    tm = _pick_tile(n_p, min_blocks=2)
    tn = _pick_tile(d_out_p)
    tk = _pick_tile(d_in_p)
    grid = (n_p // tm, d_out_p // tn, d_in_p // tk)
    flops = 2 * n_p * d_in_p * d_out_p
    bytes_accessed = (x_p.size * x_p.dtype.itemsize * grid[1]
                      + w_p.size * w_p.dtype.itemsize * grid[0]
                      + b_p.size * 4
                      + n_p * d_out_p * jnp.dtype(out_dtype).itemsize)
    return pl.pallas_call(
        _linear_kernel,
        out_shape=jax.ShapeDtypeStruct((n_p, d_out_p), out_dtype),
        grid_spec=pltpu.PrefetchScalarGridSpec(
            num_scalar_prefetch=0,
            grid=grid,
            in_specs=[
                pl.BlockSpec((tm, tk), lambda i, j, k: (i, k)),     # X tile
                pl.BlockSpec((tk, tn), lambda i, j, k: (k, j)),     # W tile
                pl.BlockSpec((1, tn), lambda i, j, k: (0, j)),      # bias tile
            ],
            out_specs=pl.BlockSpec((tm, tn), lambda i, j, k: (i, j)),
            scratch_shapes=[pltpu.VMEM((tm, tn), jnp.float32)],
        ),
        compiler_params=pltpu.CompilerParams(
            dimension_semantics=("parallel", "parallel", "arbitrary"),
            vmem_limit_bytes=VMEM_LIMIT_BYTES),
        cost_estimate=pl.CostEstimate(flops=flops, transcendentals=0,
                                      bytes_accessed=bytes_accessed),
    )(x_p, w_p, b_p)


# --------------------------------------------------------------------------- #
# Public entry points
# --------------------------------------------------------------------------- #
@jax.jit
def prepare_adjacency(adjacency_matrix):
    """Pad + cast the adjacency to the kernel's bf16 layout ONCE.

    The adjacency is layer-independent, so hoist this out of gcn_layer and reuse
    the result across layers / steps: it removes the O(N^2) pad/cast prepass that
    otherwise roughly doubles the end-to-end HBM traffic on A.
    """
    n = adjacency_matrix.shape[0]
    n_p = _padded_nodes(n)
    return _pad2(adjacency_matrix, n_p, n_p, jnp.bfloat16)


@jax.jit
def gcn_layer(adjacency_matrix, node_features, weight, bias):
    """GCN layer forward: (A @ X) @ W + b  ==  A @ (X @ W) + b.

    adjacency_matrix: (N, N) raw, or the (Np, Np) bf16 output of prepare_adjacency
    node_features:    (N, D_in)
    weight:           (D_in, D_out)   -- torch linear.weight.T
    bias:             (D_out,)
    returns:          (N, D_out) in node_features.dtype

    Precision: MXU inputs are bf16, all accumulation is f32 (deviates slightly
    from the pure-f32 PyTorch module; see tolerances in __main__).
    """
    n = node_features.shape[0]
    d_in, d_out = weight.shape
    out_dtype = node_features.dtype

    n_p = _padded_nodes(n)
    d_in_p = _pad_feature_dim(d_in)
    d_out_p = _pad_feature_dim(d_out)

    if adjacency_matrix.shape == (n_p, n_p):
        a_p = adjacency_matrix                 # already padded/aligned; kernel casts per tile
    else:
        a_p = _pad2(adjacency_matrix, n_p, n_p, jnp.bfloat16)

    x_p = _pad2(node_features, n_p, d_in_p, jnp.bfloat16)
    w_p = _pad2(weight, d_in_p, d_out_p, jnp.bfloat16)
    b_p = jnp.zeros((1, d_out_p), jnp.float32).at[0, :d_out].set(
        bias.astype(jnp.float32))

    if d_out < d_in:
        # Reordered algebra: Y = X @ W (cheap prologue), then stream A against the
        # narrower Y -> 2*N^2*D_out FLOPs and a Dp_out-wide f32 accumulator.
        zero_b = jnp.zeros((1, d_out_p), jnp.float32)
        y_p = _call_linear(x_p, w_p, zero_b, jnp.bfloat16)
        out_p = _call_aggregate(a_p, y_p, b_p, out_dtype)
    elif 2 * d_in_p * d_out_p * 2 <= RESIDENT_W_BYTES:
        # D_out >= D_in and W small enough to stay resident (double buffered):
        # single fused pass, no intermediate round-trip through HBM.
        out_p = _call_fused(a_p, x_p, w_p, b_p, out_dtype)
    else:
        # Large W: keep VMEM bounded (v7x: 64 MiB) by tiling W along D_out in a
        # separate linear pass; the N^2 aggregation still streams the narrow X.
        zero_b = jnp.zeros((1, d_in_p), jnp.float32)
        s_p = _call_aggregate(a_p, x_p, zero_b, jnp.bfloat16)
        out_p = _call_linear(s_p, w_p, b_p, out_dtype)

    return out_p[:n, :d_out]


# --------------------------------------------------------------------------- #
# References & demo
# --------------------------------------------------------------------------- #
def _ref_f32(a, x, w, b):
    return (a @ x) @ w + b


def _ref_mixed_fused(a, x, w, b):        # matches the (A@X)@W kernel precision pipeline
    s = jnp.dot(a.astype(jnp.bfloat16), x.astype(jnp.bfloat16),
                preferred_element_type=jnp.float32)
    return jnp.dot(s.astype(jnp.bfloat16), w.astype(jnp.bfloat16),
                   preferred_element_type=jnp.float32) + b


def _ref_mixed_reordered(a, x, w, b):    # matches the A@(X@W) kernel precision pipeline
    y = jnp.dot(x.astype(jnp.bfloat16), w.astype(jnp.bfloat16),
                preferred_element_type=jnp.float32)
    return jnp.dot(a.astype(jnp.bfloat16), y.astype(jnp.bfloat16),
                   preferred_element_type=jnp.float32) + b


def _make_problem(key, n, d_in, d_out):
    k_adj, k_feat, k_w, k_b = jax.random.split(key, 4)
    adjacency = jax.random.uniform(k_adj, (n, n), dtype=jnp.float32)
    features = jax.random.normal(k_feat, (n, d_in), dtype=jnp.float32)
    bound = 1.0 / (d_in ** 0.5)
    # torch stores weight as (D_out, D_in); we keep its transpose (D_in, D_out).
    weight = jax.random.uniform(k_w, (d_in, d_out), jnp.float32, -bound, bound)
    bias = jax.random.uniform(k_b, (d_out,), jnp.float32, -bound, bound)
    return adjacency, features, weight, bias


if __name__ == "__main__":
    key = jax.random.PRNGKey(0)
    k1, k2, k3, k4 = jax.random.split(key, 4)

    # 1) Small case matching the module demo (8 nodes, 32 -> 32): fused path.
    a1, x1, w1, b1 = _make_problem(k1, 8, 32, 32)
    out1 = gcn_layer(a1, x1, w1, b1)
    jax.block_until_ready(out1)
    assert out1.shape == (8, 32)
    assert bool(jnp.allclose(out1, _ref_mixed_fused(a1, x1, w1, b1), atol=5e-2, rtol=2e-2))
    assert bool(jnp.allclose(out1, _ref_f32(a1, x1, w1, b1), atol=2e-1, rtol=5e-2))

    # 2) Dim-reducing layer (300 nodes, 96 -> 72): reordered A @ (X @ W) path,
    #    with the padded bf16 adjacency prepared once (reusable across layers).
    a2, x2, w2, b2 = _make_problem(k2, 300, 96, 72)
    a2_prep = prepare_adjacency(a2)
    out2 = gcn_layer(a2_prep, x2, w2, b2)
    jax.block_until_ready(out2)
    assert out2.shape == (300, 72)
    assert bool(jnp.allclose(out2, _ref_mixed_reordered(a2, x2, w2, b2), atol=1e-1, rtol=2e-2))
    assert bool(jnp.allclose(out2, _ref_f32(a2, x2, w2, b2), atol=5e-1, rtol=5e-2))

    # 3) Dim-expanding layer (260 nodes, 64 -> 160): fused path with resident W.
    a3, x3, w3, b3 = _make_problem(k3, 260, 64, 160)
    out3 = gcn_layer(a3, x3, w3, b3)
    jax.block_until_ready(out3)
    assert out3.shape == (260, 160)
    assert bool(jnp.allclose(out3, _ref_mixed_fused(a3, x3, w3, b3), atol=1e-1, rtol=2e-2))
    assert bool(jnp.allclose(out3, _ref_f32(a3, x3, w3, b3), atol=5e-1, rtol=5e-2))

    # 4) 128-aligned graph passed raw (f32): no pad/cast prepass of A at all,
    #    each A tile is cast to bf16 inside the kernel.
    a4, x4, w4, b4 = _make_problem(k4, 128, 32, 32)
    out4 = gcn_layer(a4, x4, w4, b4)
    jax.block_until_ready(out4)
    assert out4.shape == (128, 32)
    assert bool(jnp.allclose(out4, _ref_mixed_fused(a4, x4, w4, b4), atol=1e-1, rtol=2e-2))
    assert bool(jnp.allclose(out4, _ref_f32(a4, x4, w4, b4), atol=5e-1, rtol=5e-2))

    print("KERNEL_OK")
</pallas_src>

<mosaic_0001>
module attributes {stable_mosaic.version = 11 : i64} {
  func.func @_fused_kernel(%arg0: i32, %arg1: i32, %arg2: memref<128x128xbf16, #tpu.memory_space<vmem>>, %arg3: memref<128x128xbf16, #tpu.memory_space<vmem>>, %arg4: memref<128x128xbf16, #tpu.memory_space<vmem>>, %arg5: memref<1x128xf32, #tpu.memory_space<vmem>>, %arg6: memref<128x128xf32, #tpu.memory_space<vmem>>, %arg7: memref<128x128xf32, #tpu.memory_space<vmem>>) attributes {dimension_semantics = [#tpu.dimension_semantics<parallel>, #tpu.dimension_semantics<arbitrary>], iteration_bounds = array<i64: 1, 1>, scalar_prefetch = 0 : i64, scratch_operands = 1 : i64, tpu.core_type = #tpu.core_type<tc>, window_params = [{transform_indices = @transform_0, window_bounds = array<i64: 128, 128>}, {transform_indices = @transform_1, window_bounds = array<i64: 128, 128>}, {pipeline_mode = #tpu.pipeline_mode<synchronous>, transform_indices = @transform_2, window_bounds = array<i64: 128, 128>}, {pipeline_mode = #tpu.pipeline_mode<synchronous>, transform_indices = @transform_3, window_bounds = array<i64: 1, 128>}, {transform_indices = @transform_4, window_bounds = array<i64: 128, 128>}]} {
    %c0_i32 = arith.constant 0 : i32
    %0 = arith.cmpi eq, %arg1, %c0_i32 : i32
    %1 = arith.extui %0 : i1 to i32
    %c0_i32_0 = arith.constant 0 : i32
    %2 = arith.cmpi ne, %1, %c0_i32_0 : i32
    scf.if %2 {
      %cst_10 = arith.constant 0.000000e+00 : f32
      %12 = vector.broadcast %cst_10 : f32 to vector<128x128xf32>
      %c0_11 = arith.constant 0 : index
      %c0_12 = arith.constant 0 : index
      %13 = vector.load %arg7[%c0_11, %c0_12] : memref<128x128xf32, #tpu.memory_space<vmem>>, vector<128x128xf32>
      tpu.vector_store %arg7[%c0_11, %c0_12], %12 {strides = array<i32>} : memref<128x128xf32, #tpu.memory_space<vmem>>, vector<128x128xf32>,
    } else {
    }
    %c0 = arith.constant 0 : index
    %c0_1 = arith.constant 0 : index
    %3 = vector.load %arg7[%c0, %c0_1] : memref<128x128xf32, #tpu.memory_space<vmem>>, vector<128x128xf32>
    %c0_2 = arith.constant 0 : index
    %c0_3 = arith.constant 0 : index
    %4 = vector.load %arg2[%c0_2, %c0_3] : memref<128x128xbf16, #tpu.memory_space<vmem>>, vector<128x128xbf16>
    %c0_4 = arith.constant 0 : index
    %c0_5 = arith.constant 0 : index
    %5 = vector.load %arg3[%c0_4, %c0_5] : memref<128x128xbf16, #tpu.memory_space<vmem>>, vector<128x128xbf16>
    %cst = arith.constant dense<0.000000e+00> : vector<128x128xf32>
    %6 = tpu.matmul %4, %5, %cst {dimension_numbers = #tpu.dot_dimension_numbers<[1], [0], [0], [1], [0, 0, 1, 1], [], []>} : vector<128x128xbf16>, vector<128x128xbf16>, vector<128x128xf32> -> vector<128x128xf32>
    %7 = arith.addf %3, %6 : vector<128x128xf32>
    %c0_6 = arith.constant 0 : index
    %c0_7 = arith.constant 0 : index
    %8 = vector.load %arg7[%c0_6, %c0_7] : memref<128x128xf32, #tpu.memory_space<vmem>>, vector<128x128xf32>
    tpu.vector_store %arg7[%c0_6, %c0_7], %7 {strides = array<i32>} : memref<128x128xf32, #tpu.memory_space<vmem>>, vector<128x128xf32>,
    %c0_i32_8 = arith.constant 0 : i32
    %9 = arith.cmpi eq, %arg1, %c0_i32_8 : i32
    %10 = arith.extui %9 : i1 to i32
    %c0_i32_9 = arith.constant 0 : i32
    %11 = arith.cmpi ne, %10, %c0_i32_9 : i32
    scf.if %11 {
      %c0_10 = arith.constant 0 : index
      %c0_11 = arith.constant 0 : index
      %12 = vector.load %arg7[%c0_10, %c0_11] : memref<128x128xf32, #tpu.memory_space<vmem>>, vector<128x128xf32>
      %13 = arith.truncf %12 : vector<128x128xf32> to vector<128x128xbf16>
      %c0_12 = arith.constant 0 : index
      %c0_13 = arith.constant 0 : index
      %14 = vector.load %arg4[%c0_12, %c0_13] : memref<128x128xbf16, #tpu.memory_space<vmem>>, vector<128x128xbf16>
      %cst_14 = arith.constant dense<0.000000e+00> : vector<128x128xf32>
      %15 = tpu.matmul %13, %14, %cst_14 {dimension_numbers = #tpu.dot_dimension_numbers<[1], [0], [0], [1], [0, 0, 1, 1], [], []>} : vector<128x128xbf16>, vector<128x128xbf16>, vector<128x128xf32> -> vector<128x128xf32>
      %c0_15 = arith.constant 0 : index
      %c0_16 = arith.constant 0 : index
      %16 = vector.load %arg5[%c0_15, %c0_16] : memref<1x128xf32, #tpu.memory_space<vmem>>, vector<1x128xf32>
      %17 = vector.broadcast %16 : vector<1x128xf32> to vector<128x128xf32>
      %18 = arith.addf %15, %17 : vector<128x128xf32>
      %c0_17 = arith.constant 0 : index
      %c0_18 = arith.constant 0 : index
      %19 = vector.load %arg6[%c0_17, %c0_18] : memref<128x128xf32, #tpu.memory_space<vmem>>, vector<128x128xf32>
      tpu.vector_store %arg6[%c0_17, %c0_18], %18 {strides = array<i32>} : memref<128x128xf32, #tpu.memory_space<vmem>>, vector<128x128xf32>,
    } else {
    }
    return
  }
  func.func @transform_0(%arg0: i32, %arg1: i32) -> (i32, i32) {
    %c0_i32 = arith.constant 0 : i32
    return %arg0, %arg1 : i32, i32
  }
  func.func @transform_1(%arg0: i32, %arg1: i32) -> (i32, i32) {
    %c0_i32 = arith.constant 0 : i32
    %c0_i32_0 = arith.constant 0 : i32
    return %arg1, %c0_i32 : i32, i32
  }
  func.func @transform_2(%arg0: i32, %arg1: i32) -> (i32, i32) {
    %c0_i32 = arith.constant 0 : i32
    %c0_i32_0 = arith.constant 0 : i32
    %c0_i32_1 = arith.constant 0 : i32
    return %c0_i32, %c0_i32_0 : i32, i32
  }
  func.func @transform_3(%arg0: i32, %arg1: i32) -> (i32, i32) {
    %c0_i32 = arith.constant 0 : i32
    %c0_i32_0 = arith.constant 0 : i32
    %c0_i32_1 = arith.constant 0 : i32
    return %c0_i32, %c0_i32_0 : i32, i32
  }
  func.func @transform_4(%arg0: i32, %arg1: i32) -> (i32, i32) {
    %c0_i32 = arith.constant 0 : i32
    %c0_i32_0 = arith.constant 0 : i32
    return %arg0, %c0_i32 : i32, i32
  }
}

</mosaic_0001>

<llo_original>
// kernel: gcn_layer.1
$region0: #{gcn_layer.1}
  #allocation0 [shape = 'u32[]', space=smem, size = 0x4, offset = 0x4, fixed_abs, tag = 'smem constant byte address 0x4 - core index']
  #allocation1 [shape = 'u32[144,128]{1,0:T(1,128)}', space=vmem, size = 0x12000, scoped, tag = 'internal scratch']
  #allocation2 [shape = 'f32[128,128]{1,0:T(8,128)}', space=vmem, size = 0x10000, scoped, tag = 'scratch operand']
  %s0 = inlined_call_operand.vmem [shape: bf16[128,128], index: 0, kind: input, shape index: {}]
  %s1 = inlined_call_operand.vmem [shape: bf16[128,128], index: 1, kind: input, shape index: {}]
  %s2 = inlined_call_operand.vmem [shape: bf16[128,128], index: 2, kind: input, shape index: {}]
  %s3 = inlined_call_operand.vmem [shape: f32[1,128], index: 3, kind: input, shape index: {}]
  %s4 = inlined_call_operand.vmem [shape: f32[128,128], index: 4, kind: output, shape index: {}]
  %s5 = sld [smem:[#allocation0]]
  $region34: #{gcn_layer.1} parent=0
    _
  %s7 = ssub.s32 1, %s5
  %s8 = scalar_select 0, %s7, %s5
  // Predicated region
  $region2: #{gcn_layer.1} parent=0 // pred_check
    _
  $region3: #{gcn_layer.1} parent=0 // pred_check_branch
    %10 = sbr.rel (0) target = $region5
  $region4: #{gcn_layer.1} parent=0 // pred_region
    _
  $region5: #{gcn_layer.1} parent=0 // pred_fallthru
    _
  // Predicated region
  $region6: #{gcn_layer.1} parent=0 // pred_check
    _
  $region7: #{gcn_layer.1} parent=0 // pred_check_branch
    %12 = sbr.rel (0) target = $region9
  $region8: #{gcn_layer.1} parent=0 // pred_region
    _
  $region9: #{gcn_layer.1} parent=0 // pred_fallthru
    _
  // Predicated region
  $region10: #{gcn_layer.1} parent=0 // pred_check
    _
  $region11: #{gcn_layer.1} parent=0 // pred_check_branch
    %14 = sbr.rel (0) target = $region13
  $region12: #{gcn_layer.1} parent=0 // pred_region
    _
  $region13: #{gcn_layer.1} parent=0 // pred_fallthru
    _
  // Predicated region
  $region14: #{gcn_layer.1} parent=0 // pred_check
    _
  $region15: #{gcn_layer.1} parent=0 // pred_check_branch
    %16 = sbr.rel (0) target = $region17
  $region16: #{gcn_layer.1} parent=0 // pred_region
    _
  $region17: #{gcn_layer.1} parent=0 // pred_fallthru
    _
  %p18 = scmp.eq.s32.totalorder 0, 0
  // Predicated region
  $region18: #{gcn_layer.1} parent=0 // pred_check
    %p19 = pneg %p18
  $region19: #{gcn_layer.1} parent=0 // pred_check_branch
    %21 = sbr.rel (%p19) target = $region21
  $region20: #{gcn_layer.1} parent=0 // pred_region
    %22 = vst [vmem:[#allocation2] sm:$0xff] 0.0
    %23 = vst [vmem:[#allocation2 + $0x8] sm:$0xff] 0.0
    %24 = vst [vmem:[#allocation2 + $0x10] sm:$0xff] 0.0
    %25 = vst [vmem:[#allocation2 + $0x18] sm:$0xff] 0.0
    %26 = vst [vmem:[#allocation2 + $0x20] sm:$0xff] 0.0
    %27 = vst [vmem:[#allocation2 + $0x28] sm:$0xff] 0.0
    %28 = vst [vmem:[#allocation2 + $0x30] sm:$0xff] 0.0
    %29 = vst [vmem:[#allocation2 + $0x38] sm:$0xff] 0.0
    %30 = vst [vmem:[#allocation2 + $0x40] sm:$0xff] 0.0
    %31 = vst [vmem:[#allocation2 + $0x48] sm:$0xff] 0.0
    %32 = vst [vmem:[#allocation2 + $0x50] sm:$0xff] 0.0
    %33 = vst [vmem:[#allocation2 + $0x58] sm:$0xff] 0.0
    %34 = vst [vmem:[#allocation2 + $0x60] sm:$0xff] 0.0
    %35 = vst [vmem:[#allocation2 + $0x68] sm:$0xff] 0.0
    %36 = vst [vmem:[#allocation2 + $0x70] sm:$0xff] 0.0
    %37 = vst [vmem:[#allocation2 + $0x78] sm:$0xff] 0.0
  $region21: #{gcn_layer.1} parent=0 // pred_fallthru
    _
  %v38 = vld [vmem:[#allocation2] sm:$0xff]
  %v39 = vld [vmem:[#allocation2 + $0x8] sm:$0xff]
  %v40 = vld [vmem:[#allocation2 + $0x10] sm:$0xff]
  %v41 = vld [vmem:[#allocation2 + $0x18] sm:$0xff]
  %v42 = vld [vmem:[#allocation2 + $0x20] sm:$0xff]
  %v43 = vld [vmem:[#allocation2 + $0x28] sm:$0xff]
  %v44 = vld [vmem:[#allocation2 + $0x30] sm:$0xff]
  %v45 = vld [vmem:[#allocation2 + $0x38] sm:$0xff]
  %v46 = vld [vmem:[#allocation2 + $0x40] sm:$0xff]
  %v47 = vld [vmem:[#allocation2 + $0x48] sm:$0xff]
  %v48 = vld [vmem:[#allocation2 + $0x50] sm:$0xff]
  %v49 = vld [vmem:[#allocation2 + $0x58] sm:$0xff]
  %v50 = vld [vmem:[#allocation2 + $0x60] sm:$0xff]
  %v51 = vld [vmem:[#allocation2 + $0x68] sm:$0xff]
  %v52 = vld [vmem:[#allocation2 + $0x70] sm:$0xff]
  %v53 = vld [vmem:[#allocation2 + $0x78] sm:$0xff]
  %v54 = vld [vmem:[%s0] sm:$0xf]
  %v55 = vld [vmem:[%s0 + $0x4] sm:$0xf]
  %v56 = vld [vmem:[%s0 + $0x8] sm:$0xf]
  %v57 = vld [vmem:[%s0 + $0xc] sm:$0xf]
  %v58 = vld [vmem:[%s0 + $0x10] sm:$0xf]
  %v59 = vld [vmem:[%s0 + $0x14] sm:$0xf]
  %v60 = vld [vmem:[%s0 + $0x18] sm:$0xf]
  %v61 = vld [vmem:[%s0 + $0x1c] sm:$0xf]
  %v62 = vld [vmem:[%s0 + $0x20] sm:$0xf]
  %v63 = vld [vmem:[%s0 + $0x24] sm:$0xf]
  %v64 = vld [vmem:[%s0 + $0x28] sm:$0xf]
  %v65 = vld [vmem:[%s0 + $0x2c] sm:$0xf]
  %v66 = vld [vmem:[%s0 + $0x30] sm:$0xf]
  %v67 = vld [vmem:[%s0 + $0x34] sm:$0xf]
  %v68 = vld [vmem:[%s0 + $0x38] sm:$0xf]
  %v69 = vld [vmem:[%s0 + $0x3c] sm:$0xf]
  %v70 = vld [vmem:[%s1] sm:$0xf]
  %v71 = vld [vmem:[%s1 + $0x4] sm:$0xf]
  %v72 = vld [vmem:[%s1 + $0x8] sm:$0xf]
  %v73 = vld [vmem:[%s1 + $0xc] sm:$0xf]
  %v74 = vld [vmem:[%s1 + $0x10] sm:$0xf]
  %v75 = vld [vmem:[%s1 + $0x14] sm:$0xf]
  %v76 = vld [vmem:[%s1 + $0x18] sm:$0xf]
  %v77 = vld [vmem:[%s1 + $0x1c] sm:$0xf]
  %v78 = vld [vmem:[%s1 + $0x20] sm:$0xf]
  %v79 = vld [vmem:[%s1 + $0x24] sm:$0xf]
  %v80 = vld [vmem:[%s1 + $0x28] sm:$0xf]
  %v81 = vld [vmem:[%s1 + $0x2c] sm:$0xf]
  %v82 = vld [vmem:[%s1 + $0x30] sm:$0xf]
  %v83 = vld [vmem:[%s1 + $0x34] sm:$0xf]
  %v84 = vld [vmem:[%s1 + $0x38] sm:$0xf]
  %v85 = vld [vmem:[%s1 + $0x3c] sm:$0xf]
  %v102 = vunpack.c.l.b16 %v54
  %v103 = vunpack.c.l.b16 %v55
  %v104 = vunpack.c.l.b16 %v56
  %v105 = vunpack.c.l.b16 %v57
  %v106 = vunpack.c.l.b16 %v58
  %v107 = vunpack.c.l.b16 %v59
  %v108 = vunpack.c.l.b16 %v60
  %v109 = vunpack.c.l.b16 %v61
  %v110 = vunpack.c.l.b16 %v62
  %v111 = vunpack.c.l.b16 %v63
  %v112 = vunpack.c.l.b16 %v64
  %v113 = vunpack.c.l.b16 %v65
  %v114 = vunpack.c.l.b16 %v66
  %v115 = vunpack.c.l.b16 %v67
  %v116 = vunpack.c.l.b16 %v68
  %v117 = vunpack.c.l.b16 %v69
  %v118 = vpack.c.b16 %v103, %v102
  %v119 = vpack.c.b16 %v105, %v104
  %v120 = vpack.c.b16 %v107, %v106
  %v121 = vpack.c.b16 %v109, %v108
  %v122 = vpack.c.b16 %v111, %v110
  %v123 = vpack.c.b16 %v113, %v112
  %v124 = vpack.c.b16 %v115, %v114
  %v125 = vpack.c.b16 %v117, %v116
  %v150 = vunpack.c.l.b16 %v70
  %v151 = vunpack.c.l.b16 %v71
  %v152 = vunpack.c.l.b16 %v72
  %v153 = vunpack.c.l.b16 %v73
  %v154 = vunpack.c.l.b16 %v74
  %v155 = vunpack.c.l.b16 %v75
  %v156 = vunpack.c.l.b16 %v76
  %v157 = vunpack.c.l.b16 %v77
  %v158 = vunpack.c.l.b16 %v78
  %v159 = vunpack.c.l.b16 %v79
  %v160 = vunpack.c.l.b16 %v80
  %v161 = vunpack.c.l.b16 %v81
  %v162 = vunpack.c.l.b16 %v82
  %v163 = vunpack.c.l.b16 %v83
  %v164 = vunpack.c.l.b16 %v84
  %v165 = vunpack.c.l.b16 %v85
  %v166 = vpack.c.b16 %v151, %v150
  %v167 = vpack.c.b16 %v153, %v152
  %v168 = vpack.c.b16 %v155, %v154
  %v169 = vpack.c.b16 %v157, %v156
  %v170 = vpack.c.b16 %v159, %v158
  %v171 = vpack.c.b16 %v161, %v160
  %v172 = vpack.c.b16 %v163, %v162
  %v173 = vpack.c.b16 %v165, %v164
  %182 = vmatprep.subr.bf16.mxu0 0
  %183 = vmatpush1.bf16.msra.mxu0 %v166
  %184 = vmatprep.subr.bf16.mxu0 0
  %185 = vmatpush1.bf16.msra.mxu0 %v167
  %186 = vmatprep.subr.bf16.mxu0 0
  %187 = vmatpush1.bf16.msra.mxu0 %v168
  %188 = vmatprep.subr.bf16.mxu0 0
  %189 = vmatpush1.bf16.msra.mxu0 %v169
  %190 = vmatprep.subr.bf16.mxu0 0
  %191 = vmatpush1.bf16.msra.mxu0 %v170
  %192 = vmatprep.subr.bf16.mxu0 0
  %193 = vmatpush1.bf16.msra.mxu0 %v171
  %194 = vmatprep.subr.bf16.mxu0 0
  %195 = vmatpush1.bf16.msra.mxu0 %v172
  %196 = vmatprep.subr.bf16.mxu0 0
  %197 = vmatpush1.bf16.msra.mxu0 %v173
  %198 = vmatprep.subr.bf16.mxu0 0
  %199 = vmatpush1.bf16.msra.mxu0 0
  %200 = vmatprep.subr.bf16.mxu0 0
  %201 = vmatpush1.bf16.msra.mxu0 0
  %202 = vmatprep.subr.bf16.mxu0 0
  %203 = vmatpush1.bf16.msra.mxu0 0
  %204 = vmatprep.subr.bf16.mxu0 0
  %205 = vmatpush1.bf16.msra.mxu0 0
  %206 = vmatprep.subr.bf16.mxu0 0
  %207 = vmatpush1.bf16.msra.mxu0 0
  %208 = vmatprep.subr.bf16.mxu0 0
  %209 = vmatpush1.bf16.msra.mxu0 0
  %210 = vmatprep.subr.bf16.mxu0 0
  %211 = vmatpush1.bf16.msra.mxu0 0
  %212 = vmatprep.subr.bf16.mxu0 0
  %213 = vmatpush1.bf16.msra.mxu0 0
  %214 = vmatprep.mubr.bf16.mxu0 0
  %215 = vmatmul.mubr.bf16.gmra.mrb[0].mxu0 %v118
  %v216 = vpop.f32.mrb[0].mxu0
  %v217 = vadd.f32 0.0, %v216
  %v218 = vpop.f32.mrb[0].mxu0
  %v219 = vpop.f32.mrb[0].mxu0
  %v220 = vadd.f32 0.0, %v219
  %v221 = vpop.f32.mrb[0].mxu0
  %222 = vmatprep.mubr.bf16.mxu0 0
  %223 = vmatmul.mubr.bf16.gmra.mrb[0].mxu0 %v119
  %v224 = vpop.f32.mrb[0].mxu0
  %v225 = vadd.f32 0.0, %v224
  %v226 = vpop.f32.mrb[0].mxu0
  %v227 = vpop.f32.mrb[0].mxu0
  %v228 = vadd.f32 0.0, %v227
  %v229 = vpop.f32.mrb[0].mxu0
  %230 = vmatprep.mubr.bf16.mxu0 0
  %231 = vmatmul.mubr.bf16.gmra.mrb[0].mxu0 %v120
  %v232 = vpop.f32.mrb[0].mxu0
  %v233 = vadd.f32 0.0, %v232
  %v234 = vpop.f32.mrb[0].mxu0
  %v235 = vpop.f32.mrb[0].mxu0
  %v236 = vadd.f32 0.0, %v235
  %v237 = vpop.f32.mrb[0].mxu0
  %238 = vmatprep.mubr.bf16.mxu0 0
  %239 = vmatmul.mubr.bf16.gmra.mrb[0].mxu0 %v121
  %v240 = vpop.f32.mrb[0].mxu0
  %v241 = vadd.f32 0.0, %v240
  %v242 = vpop.f32.mrb[0].mxu0
  %v243 = vpop.f32.mrb[0].mxu0
  %v244 = vadd.f32 0.0, %v243
  %v245 = vpop.f32.mrb[0].mxu0
  %246 = vmatprep.mubr.bf16.mxu0 0
  %247 = vmatmul.mubr.bf16.gmra.mrb[0].mxu0 %v122
  %v248 = vpop.f32.mrb[0].mxu0
  %v249 = vadd.f32 0.0, %v248
  %v250 = vpop.f32.mrb[0].mxu0
  %v251 = vpop.f32.mrb[0].mxu0
  %v252 = vadd.f32 0.0, %v251
  %v253 = vpop.f32.mrb[0].mxu0
  %254 = vmatprep.mubr.bf16.mxu0 0
  %255 = vmatmul.mubr.bf16.gmra.mrb[0].mxu0 %v123
  %v256 = vpop.f32.mrb[0].mxu0
  %v257 = vadd.f32 0.0, %v256
  %v258 = vpop.f32.mrb[0].mxu0
  %v259 = vpop.f32.mrb[0].mxu0
  %v260 = vadd.f32 0.0, %v259
  %v261 = vpop.f32.mrb[0].mxu0
  %262 = vmatprep.mubr.bf16.mxu0 0
  %263 = vmatmul.mubr.bf16.gmra.mrb[0].mxu0 %v124
  %v264 = vpop.f32.mrb[0].mxu0
  %v265 = vadd.f32 0.0, %v264
  %v266 = vpop.f32.mrb[0].mxu0
  %v267 = vpop.f32.mrb[0].mxu0
  %v268 = vadd.f32 0.0, %v267
  %v269 = vpop.f32.mrb[0].mxu0
  %270 = vmatprep.mubr.bf16.mxu0 0
  %271 = vmatmul.mubr.bf16.gmra.mrb[0].mxu0 %v125
  %v272 = vpop.f32.mrb[0].mxu0
  %v273 = vadd.f32 0.0, %v272
  %v274 = vpop.f32.mrb[0].mxu0
  %v275 = vpop.f32.mrb[0].mxu0
  %v276 = vadd.f32 0.0, %v275
  %v277 = vpop.f32.mrb[0].mxu0
  %278 = vdwg.mxu0
  %v279 = vadd.f32 %v38, %v217
  %v280 = vadd.f32 %v39, %v220
  %v281 = vadd.f32 %v40, %v225
  %v282 = vadd.f32 %v41, %v228
  %v283 = vadd.f32 %v42, %v233
  %v284 = vadd.f32 %v43, %v236
  %v285 = vadd.f32 %v44, %v241
  %v286 = vadd.f32 %v45, %v244
  %v287 = vadd.f32 %v46, %v249
  %v288 = vadd.f32 %v47, %v252
  %v289 = vadd.f32 %v48, %v257
  %v290 = vadd.f32 %v49, %v260
  %v291 = vadd.f32 %v50, %v265
  %v292 = vadd.f32 %v51, %v268
  %v293 = vadd.f32 %v52, %v273
  %v294 = vadd.f32 %v53, %v276
  %295 = vst [vmem:[#allocation2] sm:$0xff] %v279
  %296 = vst [vmem:[#allocation2 + $0x8] sm:$0xff] %v280
  %297 = vst [vmem:[#allocation2 + $0x10] sm:$0xff] %v281
  %298 = vst [vmem:[#allocation2 + $0x18] sm:$0xff] %v282
  %299 = vst [vmem:[#allocation2 + $0x20] sm:$0xff] %v283
  %300 = vst [vmem:[#allocation2 + $0x28] sm:$0xff] %v284
  %301 = vst [vmem:[#allocation2 + $0x30] sm:$0xff] %v285
  %302 = vst [vmem:[#allocation2 + $0x38] sm:$0xff] %v286
  %303 = vst [vmem:[#allocation2 + $0x40] sm:$0xff] %v287
  %304 = vst [vmem:[#allocation2 + $0x48] sm:$0xff] %v288
  %305 = vst [vmem:[#allocation2 + $0x50] sm:$0xff] %v289
  %306 = vst [vmem:[#allocation2 + $0x58] sm:$0xff] %v290
  %307 = vst [vmem:[#allocation2 + $0x60] sm:$0xff] %v291
  %308 = vst [vmem:[#allocation2 + $0x68] sm:$0xff] %v292
  %309 = vst [vmem:[#allocation2 + $0x70] sm:$0xff] %v293
  %310 = vst [vmem:[#allocation2 + $0x78] sm:$0xff] %v294
  // Predicated region
  $region22: #{gcn_layer.1} parent=0 // pred_check
    %p311 = pneg %p18
  $region23: #{gcn_layer.1} parent=0 // pred_check_branch
    %313 = sbr.rel (%p311) target = $region25
  $region24: #{gcn_layer.1} parent=0 // pred_region
    %v314 = vld [vmem:[#allocation2] sm:$0xff]
    %v315 = vld [vmem:[#allocation2 + $0x8] sm:$0xff]
    %v316 = vld [vmem:[#allocation2 + $0x10] sm:$0xff]
    %v317 = vld [vmem:[#allocation2 + $0x18] sm:$0xff]
    %v318 = vld [vmem:[#allocation2 + $0x20] sm:$0xff]
    %v319 = vld [vmem:[#allocation2 + $0x28] sm:$0xff]
    %v320 = vld [vmem:[#allocation2 + $0x30] sm:$0xff]
    %v321 = vld [vmem:[#allocation2 + $0x38] sm:$0xff]
    %v322 = vld [vmem:[#allocation2 + $0x40] sm:$0xff]
    %v323 = vld [vmem:[#allocation2 + $0x48] sm:$0xff]
    %v324 = vld [vmem:[#allocation2 + $0x50] sm:$0xff]
    %v325 = vld [vmem:[#allocation2 + $0x58] sm:$0xff]
    %v326 = vld [vmem:[#allocation2 + $0x60] sm:$0xff]
    %v327 = vld [vmem:[#allocation2 + $0x68] sm:$0xff]
    %v328 = vld [vmem:[#allocation2 + $0x70] sm:$0xff]
    %v329 = vld [vmem:[#allocation2 + $0x78] sm:$0xff]
    %v330 = vpack.c.bf16 %v315, %v314
    %v331 = vpack.c.bf16 %v317, %v316
    %v332 = vpack.c.bf16 %v319, %v318
    %v333 = vpack.c.bf16 %v321, %v320
    %v334 = vpack.c.bf16 %v323, %v322
    %v335 = vpack.c.bf16 %v325, %v324
    %v336 = vpack.c.bf16 %v327, %v326
    %v337 = vpack.c.bf16 %v329, %v328
    %v338 = vld [vmem:[%s2] sm:$0xf]
    %v339 = vld [vmem:[%s2 + $0x4] sm:$0xf]
    %v340 = vld [vmem:[%s2 + $0x8] sm:$0xf]
    %v341 = vld [vmem:[%s2 + $0xc] sm:$0xf]
    %v342 = vld [vmem:[%s2 + $0x10] sm:$0xf]
    %v343 = vld [vmem:[%s2 + $0x14] sm:$0xf]
    %v344 = vld [vmem:[%s2 + $0x18] sm:$0xf]
    %v345 = vld [vmem:[%s2 + $0x1c] sm:$0xf]
    %v346 = vld [vmem:[%s2 + $0x20] sm:$0xf]
    %v347 = vld [vmem:[%s2 + $0x24] sm:$0xf]
    %v348 = vld [vmem:[%s2 + $0x28] sm:$0xf]
    %v349 = vld [vmem:[%s2 + $0x2c] sm:$0xf]
    %v350 = vld [vmem:[%s2 + $0x30] sm:$0xf]
    %v351 = vld [vmem:[%s2 + $0x34] sm:$0xf]
    %v352 = vld [vmem:[%s2 + $0x38] sm:$0xf]
    %v353 = vld [vmem:[%s2 + $0x3c] sm:$0xf]
    %v354 = vld [vmem:[%s3] sm:$0x1]
    %v356 = vlaneseq
    %v357 = vshrl.u32 %v356, 7
    %v358 = vsub.s32 0, %v357
    %v359 = vrot.slane %v354, %v358
    %v377 = vunpack.c.l.b16 %v338
    %v378 = vunpack.c.l.b16 %v339
    %v379 = vunpack.c.l.b16 %v340
    %v380 = vunpack.c.l.b16 %v341
    %v381 = vunpack.c.l.b16 %v342
    %v382 = vunpack.c.l.b16 %v343
    %v383 = vunpack.c.l.b16 %v344
    %v384 = vunpack.c.l.b16 %v345
    %v385 = vunpack.c.l.b16 %v346
    %v386 = vunpack.c.l.b16 %v347
    %v387 = vunpack.c.l.b16 %v348
    %v388 = vunpack.c.l.b16 %v349
    %v389 = vunpack.c.l.b16 %v350
    %v390 = vunpack.c.l.b16 %v351
    %v391 = vunpack.c.l.b16 %v352
    %v392 = vunpack.c.l.b16 %v353
    %v393 = vpack.c.b16 %v378, %v377
    %v394 = vpack.c.b16 %v380, %v379
    %v395 = vpack.c.b16 %v382, %v381
    %v396 = vpack.c.b16 %v384, %v383
    %v397 = vpack.c.b16 %v386, %v385
    %v398 = vpack.c.b16 %v388, %v387
    %v399 = vpack.c.b16 %v390, %v389
    %v400 = vpack.c.b16 %v392, %v391
    %409 = vmatprep.subr.bf16.mxu0 0
    %410 = vmatpush1.bf16.msra.mxu0 %v393
    %411 = vmatprep.subr.bf16.mxu0 0
    %412 = vmatpush1.bf16.msra.mxu0 %v394
    %413 = vmatprep.subr.bf16.mxu0 0
    %414 = vmatpush1.bf16.msra.mxu0 %v395
    %415 = vmatprep.subr.bf16.mxu0 0
    %416 = vmatpush1.bf16.msra.mxu0 %v396
    %417 = vmatprep.subr.bf16.mxu0 0
    %418 = vmatpush1.bf16.msra.mxu0 %v397
    %419 = vmatprep.subr.bf16.mxu0 0
    %420 = vmatpush1.bf16.msra.mxu0 %v398
    %421 = vmatprep.subr.bf16.mxu0 0
    %422 = vmatpush1.bf16.msra.mxu0 %v399
    %423 = vmatprep.subr.bf16.mxu0 0
    %424 = vmatpush1.bf16.msra.mxu0 %v400
    %425 = vmatprep.subr.bf16.mxu0 0
    %426 = vmatpush1.bf16.msra.mxu0 0
    %427 = vmatprep.subr.bf16.mxu0 0
    %428 = vmatpush1.bf16.msra.mxu0 0
    %429 = vmatprep.subr.bf16.mxu0 0
    %430 = vmatpush1.bf16.msra.mxu0 0
    %431 = vmatprep.subr.bf16.mxu0 0
    %432 = vmatpush1.bf16.msra.mxu0 0
    %433 = vmatprep.subr.bf16.mxu0 0
    %434 = vmatpush1.bf16.msra.mxu0 0
    %435 = vmatprep.subr.bf16.mxu0 0
    %436 = vmatpush1.bf16.msra.mxu0 0
    %437 = vmatprep.subr.bf16.mxu0 0
    %438 = vmatpush1.bf16.msra.mxu0 0
    %439 = vmatprep.subr.bf16.mxu0 0
    %440 = vmatpush1.bf16.msra.mxu0 0
    %441 = vmatprep.mubr.bf16.mxu0 0
    %442 = vmatmul.mubr.bf16.gmra.mrb[0].mxu0 %v330
    %v443 = vpop.f32.mrb[0].mxu0
    %v444 = vadd.f32 %v359, %v443
    %v445 = vpop.f32.mrb[0].mxu0
    %v446 = vpop.f32.mrb[0].mxu0
    %v447 = vadd.f32 %v359, %v446
    %v448 = vpop.f32.mrb[0].mxu0
    %449 = vmatprep.mubr.bf16.mxu0 0
    %450 = vmatmul.mubr.bf16.gmra.mrb[0].mxu0 %v331
    %v451 = vpop.f32.mrb[0].mxu0
    %v452 = vadd.f32 %v359, %v451
    %v453 = vpop.f32.mrb[0].mxu0
    %v454 = vpop.f32.mrb[0].mxu0
    %v455 = vadd.f32 %v359, %v454
    %v456 = vpop.f32.mrb[0].mxu0
    %457 = vmatprep.mubr.bf16.mxu0 0
    %458 = vmatmul.mubr.bf16.gmra.mrb[0].mxu0 %v332
    %v459 = vpop.f32.mrb[0].mxu0
    %v460 = vadd.f32 %v359, %v459
    %v461 = vpop.f32.mrb[0].mxu0
    %v462 = vpop.f32.mrb[0].mxu0
    %v463 = vadd.f32 %v359, %v462
    %v464 = vpop.f32.mrb[0].mxu0
    %465 = vmatprep.mubr.bf16.mxu0 0
    %466 = vmatmul.mubr.bf16.gmra.mrb[0].mxu0 %v333
    %v467 = vpop.f32.mrb[0].mxu0
    %v468 = vadd.f32 %v359, %v467
    %v469 = vpop.f32.mrb[0].mxu0
    %v470 = vpop.f32.mrb[0].mxu0
    %v471 = vadd.f32 %v359, %v470
    %v472 = vpop.f32.mrb[0].mxu0
    %473 = vmatprep.mubr.bf16.mxu0 0
    %474 = vmatmul.mubr.bf16.gmra.mrb[0].mxu0 %v334
    %v475 = vpop.f32.mrb[0].mxu0
    %v476 = vadd.f32 %v359, %v475
    %v477 = vpop.f32.mrb[0].mxu0
    %v478 = vpop.f32.mrb[0].mxu0
    %v479 = vadd.f32 %v359, %v478
    %v480 = vpop.f32.mrb[0].mxu0
    %481 = vmatprep.mubr.bf16.mxu0 0
    %482 = vmatmul.mubr.bf16.gmra.mrb[0].mxu0 %v335
    %v483 = vpop.f32.mrb[0].mxu0
    %v484 = vadd.f32 %v359, %v483
    %v485 = vpop.f32.mrb[0].mxu0
    %v486 = vpop.f32.mrb[0].mxu0
    %v487 = vadd.f32 %v359, %v486
    %v488 = vpop.f32.mrb[0].mxu0
    %489 = vmatprep.mubr.bf16.mxu0 0
    %490 = vmatmul.mubr.bf16.gmra.mrb[0].mxu0 %v336
    %v491 = vpop.f32.mrb[0].mxu0
    %v492 = vadd.f32 %v359, %v491
    %v493 = vpop.f32.mrb[0].mxu0
    %v494 = vpop.f32.mrb[0].mxu0
    %v495 = vadd.f32 %v359, %v494
    %v496 = vpop.f32.mrb[0].mxu0
    %497 = vmatprep.mubr.bf16.mxu0 0
    %498 = vmatmul.mubr.bf16.gmra.mrb[0].mxu0 %v337
    %v499 = vpop.f32.mrb[0].mxu0
    %v500 = vadd.f32 %v359, %v499
    %v501 = vpop.f32.mrb[0].mxu0
    %v502 = vpop.f32.mrb[0].mxu0
    %v503 = vadd.f32 %v359, %v502
    %v504 = vpop.f32.mrb[0].mxu0
    %505 = vdwg.mxu0
    %506 = vst [vmem:[%s4] sm:$0xff] %v444
    %507 = vst [vmem:[%s4 + $0x8] sm:$0xff] %v447
    %508 = vst [vmem:[%s4 + $0x10] sm:$0xff] %v452
    %509 = vst [vmem:[%s4 + $0x18] sm:$0xff] %v455
    %510 = vst [vmem:[%s4 + $0x20] sm:$0xff] %v460
    %511 = vst [vmem:[%s4 + $0x28] sm:$0xff] %v463
    %512 = vst [vmem:[%s4 + $0x30] sm:$0xff] %v468
    %513 = vst [vmem:[%s4 + $0x38] sm:$0xff] %v471
    %514 = vst [vmem:[%s4 + $0x40] sm:$0xff] %v476
    %515 = vst [vmem:[%s4 + $0x48] sm:$0xff] %v479
    %516 = vst [vmem:[%s4 + $0x50] sm:$0xff] %v484
    %517 = vst [vmem:[%s4 + $0x58] sm:$0xff] %v487
    %518 = vst [vmem:[%s4 + $0x60] sm:$0xff] %v492
    %519 = vst [vmem:[%s4 + $0x68] sm:$0xff] %v495
    %520 = vst [vmem:[%s4 + $0x70] sm:$0xff] %v500
    %521 = vst [vmem:[%s4 + $0x78] sm:$0xff] %v503
  $region25: #{gcn_layer.1} parent=0 // pred_fallthru
    _
  // Predicated region
  $region26: #{gcn_layer.1} parent=0 // pred_check
    _
  $region27: #{gcn_layer.1} parent=0 // pred_check_branch
    %523 = sbr.rel (0) target = $region29
  $region28: #{gcn_layer.1} parent=0 // pred_region
    _
  $region29: #{gcn_layer.1} parent=0 // pred_fallthru
    _
  // Predicated region
  $region30: #{gcn_layer.1} parent=0 // pred_check
    _
  $region31: #{gcn_layer.1} parent=0 // pred_check_branch
    %525 = sbr.rel (0) target = $region33
  $region32: #{gcn_layer.1} parent=0 // pred_region
    _
  $region33: #{gcn_layer.1} parent=0 // pred_fallthru
    _

</llo_original>
